<compile_context>
chip_gen: v6e
topology: v6e:2x2x1
jax: 0.10.0
libtpu: 0.0.40
codegen_flags: <defaults>
</compile_context>

<pallas_src>
import functools

import jax
import jax.numpy as jnp
from jax.experimental import pallas as pl
from jax.experimental.pallas import tpu as pltpu


# Sublane packing per element size (rows per vreg sublane group).
_SUBLANES = {4: 8, 2: 16, 1: 32}


def _affine_kernel(x_ref, scale_ref, bias_ref, o_ref, *, r_blk):
    # scale/bias are resident (full (R_pad, 1) block, constant index map);
    # slice out this grid step's rows.  r_blk is a multiple of the sublane
    # packing (or equal to the full row count), so the start is aligned.
    r0 = pl.multiple_of(pl.program_id(0) * r_blk, r_blk)
    s = scale_ref[pl.ds(r0, r_blk), :]
    b = bias_ref[pl.ds(r0, r_blk), :]
    # FMA in f32 (the kernel is HBM-bound; the extra VPU work is free),
    # cast only at the store.
    o_ref[...] = (x_ref[...].astype(jnp.float32) * s + b).astype(o_ref.dtype)


def _pick_target_block_bytes():
    """Per-generation x-block budget.

    v7x (64 MiB VMEM/TC, ~3.2 TB/s HBM): larger blocks amortize the fixed
    ~0.35us per-grid-step cost.  v5e/v6e (128 MiB VMEM): ~4 MiB already sits
    near the HBM roofline.
    """
    try:
        cap = getattr(pltpu.get_tpu_info(), "vmem_capacity_bytes", 128 << 20)
    except Exception:
        cap = 128 << 20
    return (6 << 20) if cap <= (64 << 20) else (4 << 20)


def normalizer(x, mean, std, *, target_block_bytes=None):
    """x: NCHW image batch. Returns the Normalizer forward output."""
    N, C, H, W = x.shape
    R, L = N * C, H * W

    in_dtype = x.dtype
    # PyTorch's `input / 255` promotes integer inputs to float.
    out_dtype = in_dtype if jnp.issubdtype(in_dtype, jnp.floating) else jnp.float32
    in_itemsize = jnp.dtype(in_dtype).itemsize
    out_itemsize = jnp.dtype(out_dtype).itemsize
    sub = _SUBLANES.get(in_itemsize, 8)

    if target_block_bytes is None:
        target_block_bytes = _pick_target_block_bytes()

    # ---- per-(n, c) affine params, kept in f32 ----------------------------
    inv255 = jnp.float32(1.0 / 255.0)
    k = min(C, 3)
    mean_f = mean.astype(jnp.float32)
    std_f = std.astype(jnp.float32)
    scale_nc = jnp.full((N, C), inv255, dtype=jnp.float32)
    bias_nc = jnp.zeros((N, C), dtype=jnp.float32)
    scale_nc = scale_nc.at[0, :k].set(inv255 / std_f[:k])
    bias_nc = bias_nc.at[0, :k].set(-(mean_f[:k] / std_f[:k]))

    # ---- lane-dense view: rows = (n, c) planes, lanes = H*W ----------------
    x2 = x.reshape(R, L)

    # ---- joint (row, lane) tiling ------------------------------------------
    # Lane block: full row when it fits the budget at >= `sub` rows,
    # otherwise a multiple of 128 (last block padded; stores stay lane-dense).
    if L <= 128 or L * sub * in_itemsize <= target_block_bytes:
        l_blk = L
    else:
        l_blk = max(128, (target_block_bytes // (sub * in_itemsize)) // 128 * 128)

    # Row block: as many rows as fit, rounded to the dtype's sublane packing.
    rows_budget = max(1, target_block_bytes // (l_blk * in_itemsize))
    if rows_budget >= R:
        r_blk = R
    else:
        r_blk = max(sub, (rows_budget // sub) * sub)

    # Never emit a 1-step grid for non-tiny inputs: a single step leaves one
    # v7x TensorCore idle and disables load/compute/store pipelining.
    total_bytes = R * L * in_itemsize
    if r_blk >= R and l_blk >= L and total_bytes > (2 << 20):
        if R >= 2 * sub:
            r_blk = pl.cdiv(pl.cdiv(R, 2), sub) * sub      # < R by construction
        elif L >= 256:
            l_blk = max(128, pl.cdiv(pl.cdiv(L, 2), 128) * 128)
            if l_blk >= L:
                l_blk = 128

    grid_r = pl.cdiv(R, r_blk)
    grid_l = pl.cdiv(L, l_blk)
    grid = (grid_r, grid_l)

    # Pad the resident scale/bias so the per-block row slice never reads OOB.
    R_pad = grid_r * r_blk
    scale = jnp.pad(scale_nc.reshape(R, 1), ((0, R_pad - R), (0, 0)))
    bias = jnp.pad(bias_nc.reshape(R, 1), ((0, R_pad - R), (0, 0)))

    # Explicit VMEM budget: double-buffered x + out blocks, the resident
    # scale/bias (padded (8,128) f32 layout), plus slack.
    in_blk_bytes = r_blk * l_blk * in_itemsize
    out_blk_bytes = r_blk * l_blk * out_itemsize
    sb_bytes = 2 * 2 * (pl.cdiv(R_pad, 8) * 8) * 128 * 4
    vmem_limit = int(2 * (in_blk_bytes + out_blk_bytes) + sb_bytes + (2 << 20))
    vmem_limit = min(max(vmem_limit, 8 << 20), 48 << 20)

    cost = pl.CostEstimate(
        flops=2 * R * L,
        transcendentals=0,
        bytes_accessed=R * L * (in_itemsize + out_itemsize) + 2 * R * 4,
    )

    kernel = functools.partial(_affine_kernel, r_blk=r_blk)

    out2 = pl.pallas_call(
        kernel,
        out_shape=jax.ShapeDtypeStruct((R, L), out_dtype),
        grid=grid,
        in_specs=[
            pl.BlockSpec((r_blk, l_blk), lambda i, j: (i, j)),
            # Constant block index -> DMA'd once, stays resident in VMEM.
            pl.BlockSpec((R_pad, 1), lambda i, j: (0, 0)),
            pl.BlockSpec((R_pad, 1), lambda i, j: (0, 0)),
        ],
        out_specs=pl.BlockSpec((r_blk, l_blk), lambda i, j: (i, j)),
        compiler_params=pltpu.CompilerParams(
            dimension_semantics=("parallel", "parallel"),
            vmem_limit_bytes=vmem_limit,
        ),
        cost_estimate=cost,
    )(x2, scale, bias)

    return out2.reshape(N, C, H, W)


if __name__ == "__main__":
    key = jax.random.PRNGKey(0)
    # Small NCHW RGB image batch (module implies 3 channels get normalized).
    x = jax.random.uniform(key, (2, 3, 16, 16), dtype=jnp.float32) * 255.0

    # Module constants from __init__ (deterministic, no checkpoint needed).
    mean = jnp.array([0.485, 0.456, 0.406], dtype=jnp.float32)
    std = jnp.array([0.229, 0.224, 0.225], dtype=jnp.float32)

    out = normalizer(x, mean, std)
    jax.block_until_ready(out)

    # Pure-JAX reference of the exact PyTorch semantics.
    ref = x / 255.0
    ref = ref.at[0, :3].set(
        (ref[0, :3] - mean[:, None, None]) / std[:, None, None]
    )
    assert out.shape == x.shape and out.dtype == x.dtype
    # Divides folded into precomputed reciprocals -> last-ulp differences only.
    assert jnp.allclose(out, ref, atol=1e-5, rtol=1e-5), float(
        jnp.max(jnp.abs(out - ref))
    )

    print("KERNEL_OK")
</pallas_src>

<mosaic_0001>
module attributes {stable_mosaic.version = 11 : i64} {
  func.func @_affine_kernel(%arg0: i32, %arg1: i32, %arg2: memref<6x256xf32, #tpu.memory_space<vmem>>, %arg3: memref<6x1xf32, #tpu.memory_space<vmem>>, %arg4: memref<6x1xf32, #tpu.memory_space<vmem>>, %arg5: memref<6x256xf32, #tpu.memory_space<vmem>>) attributes {dimension_semantics = [#tpu.dimension_semantics<parallel>, #tpu.dimension_semantics<parallel>], iteration_bounds = array<i64: 1, 1>, scalar_prefetch = 0 : i64, scratch_operands = 0 : i64, tpu.core_type = #tpu.core_type<tc>, window_params = [{transform_indices = @transform_0, window_bounds = array<i64: 6, 256>}, {pipeline_mode = #tpu.pipeline_mode<synchronous>, transform_indices = @transform_1, window_bounds = array<i64: 6, 1>}, {pipeline_mode = #tpu.pipeline_mode<synchronous>, transform_indices = @transform_2, window_bounds = array<i64: 6, 1>}, {transform_indices = @transform_3, window_bounds = array<i64: 6, 256>}]} {
    %c6_i32 = arith.constant 6 : i32
    %0 = arith.muli %arg0, %c6_i32 : i32
    %1 = tpu.assume_multiple %0, 6 : i32
    %2 = arith.index_cast %1 : i32 to index
    %c0 = arith.constant 0 : index
    %3 = vector.load %arg3[%2, %c0] : memref<6x1xf32, #tpu.memory_space<vmem>>, vector<6x1xf32>
    %4 = arith.index_cast %1 : i32 to index
    %c0_0 = arith.constant 0 : index
    %5 = vector.load %arg4[%4, %c0_0] : memref<6x1xf32, #tpu.memory_space<vmem>>, vector<6x1xf32>
    %c0_1 = arith.constant 0 : index
    %c0_2 = arith.constant 0 : index
    %6 = vector.load %arg2[%c0_1, %c0_2] : memref<6x256xf32, #tpu.memory_space<vmem>>, vector<6x256xf32>
    %7 = vector.broadcast %3 : vector<6x1xf32> to vector<6x256xf32>
    %8 = arith.mulf %6, %7 : vector<6x256xf32>
    %9 = vector.broadcast %5 : vector<6x1xf32> to vector<6x256xf32>
    %10 = arith.addf %8, %9 : vector<6x256xf32>
    %c0_3 = arith.constant 0 : index
    %c0_4 = arith.constant 0 : index
    %11 = vector.load %arg5[%c0_3, %c0_4] : memref<6x256xf32, #tpu.memory_space<vmem>>, vector<6x256xf32>
    tpu.vector_store %arg5[%c0_3, %c0_4], %10 {strides = array<i32>} : memref<6x256xf32, #tpu.memory_space<vmem>>, vector<6x256xf32>,
    return
  }
  func.func @transform_0(%arg0: i32, %arg1: i32) -> (i32, i32) {
    %c0_i32 = arith.constant 0 : i32
    return %arg0, %arg1 : i32, i32
  }
  func.func @transform_1(%arg0: i32, %arg1: i32) -> (i32, i32) {
    %c0_i32 = arith.constant 0 : i32
    %c0_i32_0 = arith.constant 0 : i32
    %c0_i32_1 = arith.constant 0 : i32
    return %c0_i32, %c0_i32_0 : i32, i32
  }
  func.func @transform_2(%arg0: i32, %arg1: i32) -> (i32, i32) {
    %c0_i32 = arith.constant 0 : i32
    %c0_i32_0 = arith.constant 0 : i32
    %c0_i32_1 = arith.constant 0 : i32
    return %c0_i32, %c0_i32_0 : i32, i32
  }
  func.func @transform_3(%arg0: i32, %arg1: i32) -> (i32, i32) {
    %c0_i32 = arith.constant 0 : i32
    return %arg0, %arg1 : i32, i32
  }
}

</mosaic_0001>

<llo_original>
// kernel: tpu_custom_call.1
$region0: #{tpu_custom_call.1}
  #allocation0 [shape = 'u32[]', space=smem, size = 0x4, offset = 0x4, fixed_abs, tag = 'smem constant byte address 0x4 - core index']
  #allocation1 [shape = 'u32[144,128]{1,0:T(1,128)}', space=vmem, size = 0x12000, scoped, tag = 'internal scratch']
  %s0 = inlined_call_operand.vmem [shape: f32[6,256], index: 0, kind: input, shape index: {}]
  %s1 = inlined_call_operand.vmem [shape: f32[6,1], index: 1, kind: input, shape index: {}]
  %s2 = inlined_call_operand.vmem [shape: f32[6,1], index: 2, kind: input, shape index: {}]
  %s3 = inlined_call_operand.hbm [shape: f32[6,256], index: 3, kind: output, shape index: {}]
  %s4 = sld [smem:[#allocation0]]
  $region22: #{tpu_custom_call.1} parent=0
    _
  %s6 = ssub.s32 1, %s4
  %s7 = scalar_select 0, %s6, %s4
  $region1: #{tpu_custom_call.1} parent=0
    #allocation2 [shape = 'u8[8192]{0}', space=vmem, size = 0x2000, scoped, tag = 'output window, operand 0, single buffered']
    #allocation3 [shape = 's32[1]{0}', space=sflag, size = 0x4, scoped, tag = 'scoped memory for tpu_custom_call.1']
    %8 = vsyncpa [#allocation3], 0
    // Predicated region
    $region2: #{tpu_custom_call.1} parent=1 // pred_check
      _
    $region3: #{tpu_custom_call.1} parent=1 // pred_check_branch
      %10 = sbr.rel (0) target = $region5
    $region4: #{tpu_custom_call.1} parent=1 // pred_region
      _
    $region5: #{tpu_custom_call.1} parent=1 // pred_fallthru
      _
    // Predicated region
    $region6: #{tpu_custom_call.1} parent=1 // pred_check
      _
    $region7: #{tpu_custom_call.1} parent=1 // pred_check_branch
      %12 = sbr.rel (0) target = $region9
    $region8: #{tpu_custom_call.1} parent=1 // pred_region
      _
    $region9: #{tpu_custom_call.1} parent=1 // pred_fallthru
      _
    // Predicated region
    $region10: #{tpu_custom_call.1} parent=1 // pred_check
      _
    $region11: #{tpu_custom_call.1} parent=1 // pred_check_branch
      %14 = sbr.rel (0) target = $region13
    $region12: #{tpu_custom_call.1} parent=1 // pred_region
      _
    $region13: #{tpu_custom_call.1} parent=1 // pred_fallthru
      _
    %s15 = smul.u32 0, 6
    %s16 = scalar_lea.vmem %s1, %s15
    %v17 = vld [vmem:[%s16] sm:$0x3f]
    %s18 = scalar_lea.vmem %s2, %s15
    %v19 = vld [vmem:[%s18] sm:$0x3f]
    %v20 = vld [vmem:[%s0] sm:$0x3f]
    %v21 = vld [vmem:[%s0 + $0x8] sm:$0x3f]
    %23 = vset.pattern.permute.xlu0 0
    %24 = vperm.xlu0 %23, %v17
    %v25 = vpop.permute.xlu0 %24
    %v27 = vmul.f32 %v20, %v25
    %v28 = vmul.f32 %v21, %v25
    %30 = vset.pattern.permute.xlu0 0
    %31 = vperm.xlu0 %30, %v19
    %v32 = vpop.permute.xlu0 %31
    %v34 = vadd.f32 %v27, %v32
    %v35 = vadd.f32 %v28, %v32
    %36 = vst [vmem:[#allocation2] sm:$0x3f] %v34
    %37 = vst [vmem:[#allocation2 + $0x8] sm:$0x3f] %v35
    // Predicated region
    $region14: #{tpu_custom_call.1} parent=1 // pred_check
      _
    $region15: #{tpu_custom_call.1} parent=1 // pred_check_branch
      %39 = sbr.rel (0) target = $region17
    $region16: #{tpu_custom_call.1} parent=1 // pred_region
      %s41 = ssub.s32 256, 256
      %42 = vsyncadd [#allocation3], %s41
      %s44 = sshll.u32 [#allocation2], 4
      %s45 = int_to_ptr.vmem [resolvable:$true] %s44
      %47 = dma.vmem_to_hbm [thread:$0]  %s45, 256, %s3, [#allocation3]
    $region17: #{tpu_custom_call.1} parent=1 // pred_fallthru
      _
    // Predicated region
    $region18: #{tpu_custom_call.1} parent=1 // pred_check
      _
    $region19: #{tpu_custom_call.1} parent=1 // pred_check_branch
      %49 = sbr.rel (0) target = $region21
    $region20: #{tpu_custom_call.1} parent=1 // pred_region
      %50 = dma.done [#allocation3], 256
    $region21: #{tpu_custom_call.1} parent=1 // pred_fallthru
      _
    %51 = vsyncpa [#allocation3], 1

</llo_original>
